<compile_context>
chip_gen: v6e
topology: v6e:2x2x1
jax: 0.10.0
libtpu: 0.0.40
codegen_flags: <defaults>
</compile_context>

<pallas_src>
import functools

import jax
import jax.numpy as jnp
from jax.experimental import pallas as pl
from jax.experimental.pallas import tpu as pltpu

# Conservative budget for the double-buffered in/out blocks; works on
# v5e (raised scoped limit), v6e (32 MiB default) and v7x (64 MiB physical).
_VMEM_LIMIT_BYTES = 32 * 1024 * 1024
_BLOCK_BUDGET_BYTES = 24 * 1024 * 1024


def se_kernel(x_ref, w1t_ref, w2t_ref, o_ref):
    # x_ref: (Bn, C, HW)   w1t_ref: (C, S)   w2t_ref: (S, C)   o_ref: (Bn, C, HW)
    hw = x_ref.shape[-1]
    x = x_ref[...]                                             # native dtype tile

    # --- squeeze: global average pool over spatial dims (accumulate in f32) ---
    pooled = jnp.sum(x, axis=-1, dtype=jnp.float32) * (1.0 / hw)   # (Bn, C)

    # --- excite: fc1 (1x1 conv) + ReLU ---  (weights pre-transposed: no .T here)
    h = jnp.maximum(
        jnp.dot(pooled, w1t_ref[...].astype(jnp.float32),
                preferred_element_type=jnp.float32),
        0.0)                                                    # (Bn, S)

    # --- fc2 (1x1 conv) + Sigmoid (kept in f32) ---
    scale = jax.nn.sigmoid(
        jnp.dot(h, w2t_ref[...].astype(jnp.float32),
                preferred_element_type=jnp.float32))            # (Bn, C)

    # --- broadcast multiply directly on the native-dtype tile ---
    o_ref[...] = (x * scale[:, :, None].astype(x.dtype)).astype(o_ref.dtype)


def _choose_block_batch(N, C, HW, itemsize):
    """Largest batch tile that fits the VMEM budget, divides N, and (when
    possible) leaves >= 2 grid steps so v7x can shard batch across cores."""
    per_image_bytes = C * HW * itemsize
    # double-buffered input block + double-buffered output block ~= 4 copies
    max_bn = max(1, _BLOCK_BUDGET_BYTES // (4 * per_image_bytes))
    bn = int(min(N, max_bn))
    if bn == N and N > 1:
        bn = max(1, N // 2)
    while N % bn != 0:          # keep every block full (no partial tiles)
        bn -= 1
    return bn


@functools.partial(jax.jit, static_argnames=())
def squeeze_excitation(x, w1, w2):
    """x: (N, C, H, W) NCHW, w1: (S, C) fc1, w2: (C, S) fc2. Returns (N, C, H, W)."""
    N, C, H, W = x.shape
    S = w1.shape[0]
    HW = H * W
    x_flat = x.reshape(N, C, HW)

    # Pre-transpose the weights once at trace time (free layout plumbing).
    w1t = w1.T          # (C, S)
    w2t = w2.T          # (S, C)

    bn = _choose_block_batch(N, C, HW, x.dtype.itemsize)
    grid_n = N // bn

    out_flat = pl.pallas_call(
        se_kernel,
        out_shape=jax.ShapeDtypeStruct((N, C, HW), x.dtype),
        grid_spec=pltpu.PrefetchScalarGridSpec(
            num_scalar_prefetch=0,
            grid=(grid_n,),
            in_specs=[
                pl.BlockSpec((bn, C, HW), lambda n: (n, 0, 0)),
                pl.BlockSpec((C, S), lambda n: (0, 0)),
                pl.BlockSpec((S, C), lambda n: (0, 0)),
            ],
            out_specs=pl.BlockSpec((bn, C, HW), lambda n: (n, 0, 0)),
        ),
        compiler_params=pltpu.CompilerParams(
            dimension_semantics=("parallel",),
            vmem_limit_bytes=_VMEM_LIMIT_BYTES,
        ),
    )(x_flat, w1t, w2t)

    return out_flat.reshape(N, C, H, W)


def reference_se(x, w1, w2):
    """Pure-JAX reference mirroring the PyTorch forward."""
    pooled = jnp.mean(x.astype(jnp.float32), axis=(2, 3))        # (N, C)
    h = jnp.maximum(pooled @ w1.astype(jnp.float32).T, 0.0)      # (N, S)
    scale = jax.nn.sigmoid(h @ w2.astype(jnp.float32).T)         # (N, C)
    return (scale[:, :, None, None].astype(x.dtype) * x).astype(x.dtype)


if __name__ == "__main__":
    # Small shapes consistent with the module: N=2, C=4, S=2, H=W=16.
    N, C, S, H, W = 2, 4, 2, 16, 16

    key = jax.random.PRNGKey(0)
    kx, k1, k2 = jax.random.split(key, 3)

    x = jax.random.normal(kx, (N, C, H, W), dtype=jnp.float32)
    # Deterministic synthetic weights (Conv2d kernel_size=1, bias=False).
    w1 = jax.random.normal(k1, (S, C), dtype=jnp.float32) * 0.5   # fc1
    w2 = jax.random.normal(k2, (C, S), dtype=jnp.float32) * 0.5   # fc2

    out = squeeze_excitation(x, w1, w2)
    out = jax.block_until_ready(out)

    ref = reference_se(x, w1, w2)
    assert out.shape == (N, C, H, W)
    assert jnp.allclose(out, ref, atol=1e-5, rtol=1e-5), "mismatch vs reference"

    print("KERNEL_OK")
</pallas_src>

<mosaic_0001>
module attributes {stable_mosaic.version = 11 : i64} {
  func.func @se_kernel(%arg0: i32, %arg1: memref<1x4x256xf32, #tpu.memory_space<vmem>>, %arg2: memref<4x2xf32, #tpu.memory_space<vmem>>, %arg3: memref<2x4xf32, #tpu.memory_space<vmem>>, %arg4: memref<1x4x256xf32, #tpu.memory_space<vmem>>) attributes {dimension_semantics = [#tpu.dimension_semantics<parallel>], iteration_bounds = array<i64: 2>, scalar_prefetch = 0 : i64, scratch_operands = 0 : i64, tpu.core_type = #tpu.core_type<tc>, window_params = [{transform_indices = @transform_0, window_bounds = array<i64: 1, 4, 256>}, {pipeline_mode = #tpu.pipeline_mode<synchronous>, transform_indices = @transform_1, window_bounds = array<i64: 4, 2>}, {pipeline_mode = #tpu.pipeline_mode<synchronous>, transform_indices = @transform_2, window_bounds = array<i64: 2, 4>}, {transform_indices = @transform_3, window_bounds = array<i64: 1, 4, 256>}]} {
    %c0 = arith.constant 0 : index
    %c0_0 = arith.constant 0 : index
    %c0_1 = arith.constant 0 : index
    %0 = vector.load %arg1[%c0, %c0_0, %c0_1] : memref<1x4x256xf32, #tpu.memory_space<vmem>>, vector<1x4x256xf32>
    %cst = arith.constant dense<0.000000e+00> : vector<1x4xf32>
    %1 = vector.multi_reduction <add>, %0, %cst [2] : vector<1x4x256xf32> to vector<1x4xf32>
    %cst_2 = arith.constant 3.906250e-03 : f32
    %2 = vector.broadcast %cst_2 : f32 to vector<1x4xf32>
    %3 = arith.mulf %1, %2 : vector<1x4xf32>
    %c0_3 = arith.constant 0 : index
    %c0_4 = arith.constant 0 : index
    %4 = vector.load %arg2[%c0_3, %c0_4] : memref<4x2xf32, #tpu.memory_space<vmem>>, vector<4x2xf32>
    %cst_5 = arith.constant dense<0.000000e+00> : vector<1x2xf32>
    %5 = tpu.matmul %3, %4, %cst_5 {dimension_numbers = #tpu.dot_dimension_numbers<[1], [0], [0], [1], [0, 0, 1, 1], [], []>} : vector<1x4xf32>, vector<4x2xf32>, vector<1x2xf32> -> vector<1x2xf32>
    %cst_6 = arith.constant 0.000000e+00 : f32
    %6 = vector.broadcast %cst_6 : f32 to vector<1x2xf32>
    %7 = arith.maximumf %5, %6 : vector<1x2xf32>
    %c0_7 = arith.constant 0 : index
    %c0_8 = arith.constant 0 : index
    %8 = vector.load %arg3[%c0_7, %c0_8] : memref<2x4xf32, #tpu.memory_space<vmem>>, vector<2x4xf32>
    %cst_9 = arith.constant dense<0.000000e+00> : vector<1x4xf32>
    %9 = tpu.matmul %7, %8, %cst_9 {dimension_numbers = #tpu.dot_dimension_numbers<[1], [0], [0], [1], [0, 0, 1, 1], [], []>} : vector<1x2xf32>, vector<2x4xf32>, vector<1x4xf32> -> vector<1x4xf32>
    %10 = arith.negf %9 : vector<1x4xf32>
    %11 = math.exp %10 : vector<1x4xf32>
    %cst_10 = arith.constant 1.000000e+00 : f32
    %12 = vector.broadcast %cst_10 : f32 to vector<1x4xf32>
    %13 = arith.addf %12, %11 : vector<1x4xf32>
    %14 = arith.divf %12, %13 : vector<1x4xf32>
    %15 = vector.shape_cast %14 : vector<1x4xf32> to vector<1x4x1xf32>
    %16 = vector.broadcast %15 : vector<1x4x1xf32> to vector<1x4x256xf32>
    %17 = arith.mulf %0, %16 : vector<1x4x256xf32>
    %c0_11 = arith.constant 0 : index
    %c0_12 = arith.constant 0 : index
    %c0_13 = arith.constant 0 : index
    %18 = vector.load %arg4[%c0_11, %c0_12, %c0_13] : memref<1x4x256xf32, #tpu.memory_space<vmem>>, vector<1x4x256xf32>
    tpu.vector_store %arg4[%c0_11, %c0_12, %c0_13], %17 {strides = array<i32>} : memref<1x4x256xf32, #tpu.memory_space<vmem>>, vector<1x4x256xf32>,
    return
  }
  func.func @transform_0(%arg0: i32) -> (i32, i32, i32) {
    %c0_i32 = arith.constant 0 : i32
    %c0_i32_0 = arith.constant 0 : i32
    %c0_i32_1 = arith.constant 0 : i32
    return %arg0, %c0_i32, %c0_i32_0 : i32, i32, i32
  }
  func.func @transform_1(%arg0: i32) -> (i32, i32) {
    %c0_i32 = arith.constant 0 : i32
    %c0_i32_0 = arith.constant 0 : i32
    %c0_i32_1 = arith.constant 0 : i32
    return %c0_i32, %c0_i32_0 : i32, i32
  }
  func.func @transform_2(%arg0: i32) -> (i32, i32) {
    %c0_i32 = arith.constant 0 : i32
    %c0_i32_0 = arith.constant 0 : i32
    %c0_i32_1 = arith.constant 0 : i32
    return %c0_i32, %c0_i32_0 : i32, i32
  }
  func.func @transform_3(%arg0: i32) -> (i32, i32, i32) {
    %c0_i32 = arith.constant 0 : i32
    %c0_i32_0 = arith.constant 0 : i32
    %c0_i32_1 = arith.constant 0 : i32
    return %arg0, %c0_i32, %c0_i32_0 : i32, i32, i32
  }
}

</mosaic_0001>

<llo_original>
// kernel: squeeze_excitation.1
$region0: #{squeeze_excitation.1}
  #allocation0 [shape = 'u32[]', space=smem, size = 0x4, offset = 0x4, fixed_abs, tag = 'smem constant byte address 0x4 - core index']
  #allocation1 [shape = 'u32[144,128]{1,0:T(1,128)}', space=vmem, size = 0x12000, scoped, tag = 'internal scratch']
  %s0 = inlined_call_operand.vmem [shape: f32[2,4,256], index: 0, kind: input, shape index: {}]
  %s1 = inlined_call_operand.vmem [shape: f32[4,2], index: 1, kind: input, shape index: {}]
  %s2 = inlined_call_operand.vmem [shape: f32[2,4], index: 2, kind: input, shape index: {}]
  %s3 = inlined_call_operand.vmem [shape: f32[2,4,256], index: 3, kind: output, shape index: {}]
  %s4 = sld [smem:[#allocation0]]
  $region45: #{squeeze_excitation.1} parent=0
    _
  %s6 = ssub.s32 1, %s4
  %s7 = scalar_select 0, %s6, %s4
  loop: start=0, step=1, limit=4
  $region2: #{squeeze_excitation.1} parent=0 // loop_pre_header
    _
  $region3: #{squeeze_excitation.1} parent=0 // loop_header
    %s9 = sphi 0, %s13
    %p10 = scmp.ge.s32.totalorder %s9, 4
    %s19 = sphi 0, %s21
    %s22 = sphi 0, %s19
    %s23 = sphi 0, %s22
    %s39 = sphi 0, %s23
    %s43 = sphi 0, %s43
    %s45 = sphi 0, %s43
    %s46 = sphi 0, %s45
    %s60 = sphi 0, %s46
    %s64 = sphi 0, %s64
    %s66 = sphi 0, %s64
    %s67 = sphi 0, %s66
    %s81 = sphi 0, %s67
    %s87 = sphi 0, %s89
    %s90 = sphi 0, %s87
    %s91 = sphi 0, %s90
    %s107 = sphi 0, %s91
  $region4: #{squeeze_excitation.1} parent=0 // loop_header_branch
    %12 = sbr.rel (%p10) target = $region8
  $region5: #{squeeze_excitation.1} parent=0 // loop_body
    %s14 = ssub.s32 %s9, 1
    %s15 = ssub.s32 %s9, 2
    %s16 = sadd.s32 %s9, 1
    %s17 = ssub.s32 %s9, %s16
    %p18 = scmp.eq.s32.totalorder %s17, 0
    %s20 = sadd.s32 %s19, 1
    %s21 = scalar_select %p18, %s19, %s20
    %p24 = pneg %p18
    %p25 = scmp.eq.s32.totalorder %s9, 1
    %p26 = por %p24, %p25
    %p27 = scmp.ne.s32.totalorder %s19, %s22
    %p28 = scmp.eq.s32.totalorder %s9, 0
    %p29 = por %p27, %p28
    %p30 = scmp.ne.s32.totalorder %s19, %s22
    %p31 = scmp.eq.s32.totalorder %s14, 1
    %p32 = por %p30, %p31
    %p33 = scmp.ne.s32.totalorder %s22, %s23
    %p34 = scmp.eq.s32.totalorder %s14, 0
    %p35 = por %p33, %p34
    %p36 = scmp.ne.s32.totalorder %s22, %s23
    %p37 = scmp.eq.s32.totalorder %s15, 1
    %p38 = por %p36, %p37
    %p40 = scmp.ne.s32.totalorder %s23, %s39
    %p41 = scmp.eq.s32.totalorder %s15, 0
    %p42 = por %p40, %p41
    %s44 = sadd.s32 %s43, 1
    %p47 = scmp.eq.s32.totalorder %s9, 1
    %p48 = scmp.ne.s32.totalorder %s43, %s45
    %p49 = scmp.eq.s32.totalorder %s9, 0
    %p50 = por %p48, %p49
    %p51 = scmp.ne.s32.totalorder %s43, %s45
    %p52 = scmp.eq.s32.totalorder %s14, 1
    %p53 = por %p51, %p52
    %p54 = scmp.ne.s32.totalorder %s45, %s46
    %p55 = scmp.eq.s32.totalorder %s14, 0
    %p56 = por %p54, %p55
    %p57 = scmp.ne.s32.totalorder %s45, %s46
    %p58 = scmp.eq.s32.totalorder %s15, 1
    %p59 = por %p57, %p58
    %p61 = scmp.ne.s32.totalorder %s46, %s60
    %p62 = scmp.eq.s32.totalorder %s15, 0
    %p63 = por %p61, %p62
    %s65 = sadd.s32 %s64, 1
    %p68 = scmp.eq.s32.totalorder %s9, 1
    %p69 = scmp.ne.s32.totalorder %s64, %s66
    %p70 = scmp.eq.s32.totalorder %s9, 0
    %p71 = por %p69, %p70
    %p72 = scmp.ne.s32.totalorder %s64, %s66
    %p73 = scmp.eq.s32.totalorder %s14, 1
    %p74 = por %p72, %p73
    %p75 = scmp.ne.s32.totalorder %s66, %s67
    %p76 = scmp.eq.s32.totalorder %s14, 0
    %p77 = por %p75, %p76
    %p78 = scmp.ne.s32.totalorder %s66, %s67
    %p79 = scmp.eq.s32.totalorder %s15, 1
    %p80 = por %p78, %p79
    %p82 = scmp.ne.s32.totalorder %s67, %s81
    %p83 = scmp.eq.s32.totalorder %s15, 0
    %p84 = por %p82, %p83
    %s85 = ssub.s32 %s9, %s16
    %p86 = scmp.eq.s32.totalorder %s85, 0
    %s88 = sadd.s32 %s87, 1
    %s89 = scalar_select %p86, %s87, %s88
    %p92 = pneg %p86
    %p93 = scmp.eq.s32.totalorder %s9, 1
    %p94 = por %p92, %p93
    %p95 = scmp.ne.s32.totalorder %s87, %s90
    %p96 = scmp.eq.s32.totalorder %s9, 0
    %p97 = por %p95, %p96
    %p98 = scmp.ne.s32.totalorder %s87, %s90
    %p99 = scmp.eq.s32.totalorder %s14, 1
    %p100 = por %p98, %p99
    %p101 = scmp.ne.s32.totalorder %s90, %s91
    %p102 = scmp.eq.s32.totalorder %s14, 0
    %p103 = por %p101, %p102
    %p104 = scmp.ne.s32.totalorder %s90, %s91
    %p105 = scmp.eq.s32.totalorder %s15, 1
    %p106 = por %p104, %p105
    %p108 = scmp.ne.s32.totalorder %s91, %s107
    %p109 = scmp.eq.s32.totalorder %s15, 0
    %p110 = por %p108, %p109
    %p111 = scmp.le.s32.totalorder 1, %s9
    %p112 = scmp.lt.s32.totalorder %s9, 3
    %p113 = pnand %p111, %p112
    %p114 = pneg %p113
    // Predicated region
    $region9: #{squeeze_excitation.1} parent=5 // pred_check
      _
    $region10: #{squeeze_excitation.1} parent=5 // pred_check_branch
      %116 = sbr.rel (%p113) target = $region12
    $region11: #{squeeze_excitation.1} parent=5 // pred_region
      %s117 = ssub.s32 %s9, 1
      // Predicated region
      $region13: #{squeeze_excitation.1} parent=11 // pred_check
        %p118 = pneg %p56
      $region14: #{squeeze_excitation.1} parent=11 // pred_check_branch
        %120 = sbr.rel (%p118) target = $region16
      $region15: #{squeeze_excitation.1} parent=11 // pred_region
        _
      $region16: #{squeeze_excitation.1} parent=11 // pred_fallthru
        _
      // Predicated region
      $region17: #{squeeze_excitation.1} parent=11 // pred_check
        %p121 = pneg %p77
      $region18: #{squeeze_excitation.1} parent=11 // pred_check_branch
        %123 = sbr.rel (%p121) target = $region20
      $region19: #{squeeze_excitation.1} parent=11 // pred_region
        _
      $region20: #{squeeze_excitation.1} parent=11 // pred_fallthru
        _
    $region12: #{squeeze_excitation.1} parent=5 // pred_fallthru
      _
    %p124 = scmp.lt.s32.totalorder %s9, 2
    // Predicated region
    $region21: #{squeeze_excitation.1} parent=5 // pred_check
      %p125 = pneg %p124
    $region22: #{squeeze_excitation.1} parent=5 // pred_check_branch
      %127 = sbr.rel (%p125) target = $region24
    $region23: #{squeeze_excitation.1} parent=5 // pred_region
      // Predicated region
      $region25: #{squeeze_excitation.1} parent=23 // pred_check
        %p128 = pneg %p29
      $region26: #{squeeze_excitation.1} parent=23 // pred_check_branch
        %130 = sbr.rel (%p128) target = $region28
      $region27: #{squeeze_excitation.1} parent=23 // pred_region
        %p131 = scmp.lt.s32.totalorder %s9, 1
        %s132 = scalar_select %p131, %s9, 1
        %s133 = smul.addr %s132, 2
        %s134 = smul.addr %s133, 4
        %s135 = scalar_lea.vmem %s0, %s134
      $region28: #{squeeze_excitation.1} parent=23 // pred_fallthru
        _
    $region24: #{squeeze_excitation.1} parent=5 // pred_fallthru
      _
    %p136 = scmp.le.s32.totalorder 1, %s9
    %p137 = scmp.lt.s32.totalorder %s9, 3
    %p138 = pnand %p136, %p137
    %p139 = pneg %p138
    // Predicated region
    $region29: #{squeeze_excitation.1} parent=5 // pred_check
      _
    $region30: #{squeeze_excitation.1} parent=5 // pred_check_branch
      %141 = sbr.rel (%p138) target = $region32
    $region31: #{squeeze_excitation.1} parent=5 // pred_region
      %s142 = ssub.s32 %s9, 1
      %p143 = scmp.lt.s32.totalorder %s14, 1
      %s144 = scalar_select %p143, %s14, 1
      %s145 = smul.addr %s144, 2
      %s146 = smul.addr %s145, 4
      %s147 = scalar_lea.vmem %s0, %s146
      %p148 = pneg %p35
      %p149 = pneg %p32
      %p150 = pneg %p56
      %p151 = pneg %p53
      %p152 = pneg %p77
      %p153 = pneg %p74
      %p154 = pneg %p103
      %p155 = pneg %p100
      %p156 = scmp.lt.s32.totalorder %s14, 1
      %s157 = scalar_select %p156, %s14, 1
      %s158 = smul.addr %s157, 2
      %s159 = smul.addr %s158, 4
      %s160 = scalar_lea.vmem %s3, %s159
      %p161 = scmp.lt.s32.totalorder %s14, 1
      %s162 = scalar_select %p161, %s14, 1
      %s163 = smul.addr %s162, 2
      %s164 = smul.addr %s163, 4
      %s165 = scalar_lea.vmem %s0, %s164
      %p166 = scmp.lt.s32.totalorder %s14, 1
      %s167 = scalar_select %p166, %s14, 1
      %s168 = smul.addr %s167, 2
      %s169 = smul.addr %s168, 4
      %s170 = scalar_lea.vmem %s3, %s169
      %v171 = vld [vmem:[%s165] sm:$0xff]
      %v173 = vcombine.high %v171, %v171
      %vm175 = vcmask 1043456
      %v176 = vsel %vm175, %v171, 0.0
      %v177 = vsel %vm175, %v173, 0.0
      %v178 = vadd.f32 %v176, %v177
      %179 = vadd.xlane.f32.xlu0 %v178
      %v180 = vpop.xlane.xlu0 %179
      %v181 = vmul.f32 %v180, 0.00390625
      %v182 = vld [vmem:[%s1] sm:$0xf]
      %v184 = vlaneseq
      %v185 = vand.u32 %v184, 127
      %v186 = vlaneseq
      %v187 = vshrl.u32 %v186, 7
      %v188 = vsub.s32 %v185, %v187
      %v189 = vrot.slane %v181, %v188
      %vm190 = vcmask 31744
      %v191 = vsel %vm190, %v189, 0
      %v194 = vsel %vm175, %v182, 0
      %196 = vmatprep.subr.mxu0 0.0
      %197 = vmatpush1.msra.mxu0 0.0
      %198 = vmatprep.subr.mxu0 0.0
      %199 = vmatpush1.msra.mxu0 0.0
      %200 = vmatprep.subr.mxu0 0.0
      %201 = vmatpush1.msra.mxu0 0.0
      %202 = vmatprep.subr.mxu0 0.0
      %203 = vmatpush1.msra.mxu0 0.0
      %204 = vmatprep.subr.mxu0 0.0
      %205 = vmatpush1.msra.mxu0 0.0
      %206 = vmatprep.subr.mxu0 0.0
      %207 = vmatpush1.msra.mxu0 0.0
      %208 = vmatprep.subr.mxu0 0.0
      %209 = vmatpush1.msra.mxu0 0.0
      %210 = vmatprep.subr.mxu0 0.0
      %211 = vmatpush1.msra.mxu0 0.0
      %212 = vmatprep.subr.mxu0 0.0
      %213 = vmatpush1.msra.mxu0 0.0
      %214 = vmatprep.subr.mxu0 0.0
      %215 = vmatpush1.msra.mxu0 0.0
      %216 = vmatprep.subr.mxu0 0.0
      %217 = vmatpush1.msra.mxu0 0.0
      %218 = vmatprep.subr.mxu0 0.0
      %219 = vmatpush1.msra.mxu0 0.0
      %220 = vmatprep.subr.mxu0 0.0
      %221 = vmatpush1.msra.mxu0 0.0
      %222 = vmatprep.subr.mxu0 0.0
      %223 = vmatpush1.msra.mxu0 0.0
      %224 = vmatprep.subr.mxu0 0.0
      %225 = vmatpush1.msra.mxu0 0.0
      %226 = vmatprep.subr.mxu0 0.0
      %227 = vmatpush1.msra.mxu0 %v194
      %228 = vmatprep.subr.mxu0 0.0
      %229 = vmatpush2.msra.mxu0 0.0
      %230 = vmatprep.subr.mxu0 0.0
      %231 = vmatpush2.msra.mxu0 0.0
      %232 = vmatprep.subr.mxu0 0.0
      %233 = vmatpush2.msra.mxu0 0.0
      %234 = vmatprep.subr.mxu0 0.0
      %235 = vmatpush2.msra.mxu0 0.0
      %236 = vmatprep.subr.mxu0 0.0
      %237 = vmatpush2.msra.mxu0 0.0
      %238 = vmatprep.subr.mxu0 0.0
      %239 = vmatpush2.msra.mxu0 0.0
      %240 = vmatprep.subr.mxu0 0.0
      %241 = vmatpush2.msra.mxu0 0.0
      %242 = vmatprep.subr.mxu0 0.0
      %243 = vmatpush2.msra.mxu0 0.0
      %244 = vmatprep.subr.mxu0 0.0
      %245 = vmatpush2.msra.mxu0 0.0
      %246 = vmatprep.subr.mxu0 0.0
      %247 = vmatpush2.msra.mxu0 0.0
      %248 = vmatprep.subr.mxu0 0.0
      %249 = vmatpush2.msra.mxu0 0.0
      %250 = vmatprep.subr.mxu0 0.0
      %251 = vmatpush2.msra.mxu0 0.0
      %252 = vmatprep.subr.mxu0 0.0
      %253 = vmatpush2.msra.mxu0 0.0
      %254 = vmatprep.subr.mxu0 0.0
      %255 = vmatpush2.msra.mxu0 0.0
      %256 = vmatprep.subr.mxu0 0.0
      %257 = vmatpush2.msra.mxu0 0.0
      %258 = vmatprep.subr.mxu0 0.0
      %259 = vmatpush2.msra.mxu0 0.0
      %260 = vmatprep.mubr.f32.mxu0 0.0
      %261 = vmatmul.mubr.f32.gmra.mxu0 %v191
      %v262 = vpop.f32.mrf.mxu0
      %v263 = vadd.f32 0.0, %v262
      %v264 = vpop.f32.mrf.mxu0
      %265 = vdwg.mxu0
      %v266 = vmax.f32 %v263, 0.0
      %v267 = vld [vmem:[%s2] sm:$0x3]
      %vm268 = vcmask 15360
      %v270 = vsel %vm268, %v266, 0
      %vm272 = vcmask 1041408
      %v274 = vsel %vm272, %v267, 0
      %276 = vmatprep.subr.mxu0 0.0
      %277 = vmatpush1.msra.mxu0 0.0
      %278 = vmatprep.subr.mxu0 0.0
      %279 = vmatpush1.msra.mxu0 0.0
      %280 = vmatprep.subr.mxu0 0.0
      %281 = vmatpush1.msra.mxu0 0.0
      %282 = vmatprep.subr.mxu0 0.0
      %283 = vmatpush1.msra.mxu0 0.0
      %284 = vmatprep.subr.mxu0 0.0
      %285 = vmatpush1.msra.mxu0 0.0
      %286 = vmatprep.subr.mxu0 0.0
      %287 = vmatpush1.msra.mxu0 0.0
      %288 = vmatprep.subr.mxu0 0.0
      %289 = vmatpush1.msra.mxu0 0.0
      %290 = vmatprep.subr.mxu0 0.0
      %291 = vmatpush1.msra.mxu0 0.0
      %292 = vmatprep.subr.mxu0 0.0
      %293 = vmatpush1.msra.mxu0 0.0
      %294 = vmatprep.subr.mxu0 0.0
      %295 = vmatpush1.msra.mxu0 0.0
      %296 = vmatprep.subr.mxu0 0.0
      %297 = vmatpush1.msra.mxu0 0.0
      %298 = vmatprep.subr.mxu0 0.0
      %299 = vmatpush1.msra.mxu0 0.0
      %300 = vmatprep.subr.mxu0 0.0
      %301 = vmatpush1.msra.mxu0 0.0
      %302 = vmatprep.subr.mxu0 0.0
      %303 = vmatpush1.msra.mxu0 0.0
      %304 = vmatprep.subr.mxu0 0.0
      %305 = vmatpush1.msra.mxu0 0.0
      %306 = vmatprep.subr.mxu0 0.0
      %307 = vmatpush1.msra.mxu0 %v274
      %308 = vmatprep.subr.mxu0 0.0
      %309 = vmatpush2.msra.mxu0 0.0
      %310 = vmatprep.subr.mxu0 0.0
      %311 = vmatpush2.msra.mxu0 0.0
      %312 = vmatprep.subr.mxu0 0.0
      %313 = vmatpush2.msra.mxu0 0.0
      %314 = vmatprep.subr.mxu0 0.0
      %315 = vmatpush2.msra.mxu0 0.0
      %316 = vmatprep.subr.mxu0 0.0
      %317 = vmatpush2.msra.mxu0 0.0
      %318 = vmatprep.subr.mxu0 0.0
      %319 = vmatpush2.msra.mxu0 0.0
      %320 = vmatprep.subr.mxu0 0.0
      %321 = vmatpush2.msra.mxu0 0.0
      %322 = vmatprep.subr.mxu0 0.0
      %323 = vmatpush2.msra.mxu0 0.0
      %324 = vmatprep.subr.mxu0 0.0
      %325 = vmatpush2.msra.mxu0 0.0
      %326 = vmatprep.subr.mxu0 0.0
      %327 = vmatpush2.msra.mxu0 0.0
      %328 = vmatprep.subr.mxu0 0.0
      %329 = vmatpush2.msra.mxu0 0.0
      %330 = vmatprep.subr.mxu0 0.0
      %331 = vmatpush2.msra.mxu0 0.0
      %332 = vmatprep.subr.mxu0 0.0
      %333 = vmatpush2.msra.mxu0 0.0
      %334 = vmatprep.subr.mxu0 0.0
      %335 = vmatpush2.msra.mxu0 0.0
      %336 = vmatprep.subr.mxu0 0.0
      %337 = vmatpush2.msra.mxu0 0.0
      %338 = vmatprep.subr.mxu0 0.0
      %339 = vmatpush2.msra.mxu0 0.0
      %340 = vmatprep.mubr.f32.mxu0 0.0
      %341 = vmatmul.mubr.f32.gmra.mxu0 %v270
      %v342 = vpop.f32.mrf.mxu0
      %v343 = vadd.f32 0.0, %v342
      %v344 = vpop.f32.mrf.mxu0
      %345 = vdwg.mxu0
      %v346 = vxor.u32 %v343, 2147483648
      %v347 = vmul.f32 %v346, 1.442695
      %v348 = vpow.pop %v347
      %v349 = vadd.f32 %v348, 1.0
      %v350 = vrcp.pop %v349
      %v351 = vmul.f32 1.0, %v350
      %v352 = vlaneseq
      %v353 = vshrl.u32 %v352, 7
      %v354 = vsub.s32 0, %v353
      %v355 = vrot.slane %v351, %v354
      %357 = vbcast.lane.b32.xlu0 %v355, 256
      %v358 = vpop.permute.xlu0 %357
      %v361 = vunpack.c.l.s4 839922192
      %v362 = vunpack.c.0.s8 %v361
      %v363 = vlaneseq
      %v364 = vshrl.u32 %v363, 7
      %v365 = vsub.s32 %v362, %v364
      %v366 = vrot.slane %v358, %v365
      %v368 = vmul.f32 %v171, %v366
      %369 = vst [vmem:[%s170] sm:$0xff] %v368
      %p370 = scmp.lt.s32.totalorder %s14, 1
      %s371 = scalar_select %p370, %s14, 1
      %s372 = smul.addr %s371, 2
      %s373 = smul.addr %s372, 4
      %s374 = scalar_lea.vmem %s3, %s373
      // Predicated region
      $region33: #{squeeze_excitation.1} parent=31 // pred_check
        %p375 = pneg %p100
      $region34: #{squeeze_excitation.1} parent=31 // pred_check_branch
        %377 = sbr.rel (%p375) target = $region36
      $region35: #{squeeze_excitation.1} parent=31 // pred_region
        _
      $region36: #{squeeze_excitation.1} parent=31 // pred_fallthru
        _
    $region32: #{squeeze_excitation.1} parent=5 // pred_fallthru
      _
    %p378 = scmp.le.s32.totalorder 2, %s9
    // Predicated region
    $region37: #{squeeze_excitation.1} parent=5 // pred_check
      %p379 = pneg %p378
    $region38: #{squeeze_excitation.1} parent=5 // pred_check_branch
      %381 = sbr.rel (%p379) target = $region40
    $region39: #{squeeze_excitation.1} parent=5 // pred_region
      %s382 = ssub.s32 %s9, 2
      // Predicated region
      $region41: #{squeeze_excitation.1} parent=39 // pred_check
        %p383 = pneg %p106
      $region42: #{squeeze_excitation.1} parent=39 // pred_check_branch
        %385 = sbr.rel (%p383) target = $region44
      $region43: #{squeeze_excitation.1} parent=39 // pred_region
        %p386 = scmp.lt.s32.totalorder %s15, 1
        %s387 = scalar_select %p386, %s15, 1
        %s388 = smul.addr %s387, 2
        %s389 = smul.addr %s388, 4
        %s390 = scalar_lea.vmem %s3, %s389
      $region44: #{squeeze_excitation.1} parent=39 // pred_fallthru
        _
    $region40: #{squeeze_excitation.1} parent=5 // pred_fallthru
      _
  $region6: #{squeeze_excitation.1} parent=0 // loop_footer
    %s13 = sadd.s32 1, %s9
  $region7: #{squeeze_excitation.1} parent=0 // loop_footer_branch
    %8 = sbr.rel target = $region3
  $region8: #{squeeze_excitation.1} parent=0 // loop_exit
    _

</llo_original>
